<compile_context>
chip_gen: v6e
topology: v6e:2x2x1
jax: 0.10.0
libtpu: 0.0.40
codegen_flags: <defaults>
</compile_context>

<pallas_src>
import math

import jax
import jax.numpy as jnp
from jax import lax
from jax.experimental import pallas as pl
from jax.experimental.pallas import tpu as pltpu


_INV_SQRT2 = 1.0 / math.sqrt(2.0)


def _gelu_exact(x):
    # nn.GELU() default: 0.5 * x * (1 + erf(x / sqrt(2)))  (exact, erf-based)
    return 0.5 * x * (1.0 + lax.erf(x * _INV_SQRT2))


def _ff_kernel(x_ref, w1_ref, b1_ref, w2_ref, b2_ref, o_ref, acc_ref):
    # grid = (token tiles, inner-dim chunks); inner-chunk axis is the reduction.
    j = pl.program_id(1)

    @pl.when(j == 0)
    def _():
        acc_ref[...] = jnp.zeros_like(acc_ref)

    # First matmul on this inner chunk (MXU, f32 accumulate), bias + exact GELU.
    h = jnp.dot(x_ref[...], w1_ref[...], preferred_element_type=jnp.float32)
    h = _gelu_exact(h + b1_ref[...])

    # Dropout(p=0.0) is the identity at inference -> nothing to do.
    # Second matmul for this chunk, accumulated in the f32 VMEM scratch.
    acc_ref[...] += jnp.dot(h.astype(w2_ref.dtype), w2_ref[...],
                            preferred_element_type=jnp.float32)

    @pl.when(j == pl.num_programs(1) - 1)
    def _():
        o_ref[...] = (acc_ref[...] + b2_ref[...]).astype(o_ref.dtype)


def _round_up(x, m):
    return (x + m - 1) // m * m


def _pick_inner_tile(inner, want):
    """Largest chunk <= want that divides `inner` and is lane-aligned (128)."""
    if inner <= want:
        return inner
    for cand in range(min(want, inner), 0, -1):
        if inner % cand == 0 and (cand % 128 == 0 or cand == inner):
            return cand
    return inner  # fallback: whole inner dim resident


def feed_forward(x, w1, b1, w2, b2, *, tm=256, t_inner=512,
                 compute_dtype=jnp.bfloat16):
    """x: (B, S, D). w1: (D, inner), b1: (inner,), w2: (inner, Dout), b2: (Dout,).

    Returns (B, S, Dout) in x.dtype.
    """
    B, S, D = x.shape
    inner = w1.shape[1]
    dout = w2.shape[1]
    N = B * S

    # ---- tile selection --------------------------------------------------
    tm_eff = _round_up(min(tm, _round_up(N, 8)), 8)   # sublane-aligned token tile
    Np = _round_up(N, tm_eff)                         # pad tokens instead of asserting
    ti = _pick_inner_tile(inner, t_inner)             # inner-dim reduction chunk

    # ---- operand prep (bf16 MXU operands, f32 biases/accumulate) ----------
    x2 = x.reshape(N, D).astype(compute_dtype)
    if Np != N:
        x2 = jnp.pad(x2, ((0, Np - N), (0, 0)))
    w1c = w1.astype(compute_dtype)
    w2c = w2.astype(compute_dtype)
    b1_2 = b1.reshape(1, inner).astype(jnp.float32)
    b2_2 = b2.reshape(1, dout).astype(jnp.float32)

    grid = (Np // tm_eff, inner // ti)

    # ---- VMEM budget (double-buffered I/O tiles + f32 accumulator) --------
    cb = jnp.dtype(compute_dtype).itemsize
    ob = jnp.dtype(x.dtype).itemsize
    vmem_bytes = (2 * tm_eff * D * cb          # x tile (double buffered)
                  + 2 * D * ti * cb            # w1 chunk
                  + 2 * ti * 4                 # b1 chunk
                  + 2 * ti * dout * cb         # w2 chunk
                  + 2 * dout * 4               # b2
                  + 2 * tm_eff * dout * ob     # out tile
                  + tm_eff * dout * 4)         # f32 accumulator scratch
    # TODO(synk): on v7x (64 MiB VMEM/TC) shrink tm/t_inner if this exceeds ~48 MiB.
    vmem_limit = int(min(max(1.25 * vmem_bytes + (2 << 20), 16 << 20), 100 << 20))

    cost = pl.CostEstimate(
        flops=2 * N * D * inner + 2 * N * inner * dout,
        transcendentals=N * inner,
        bytes_accessed=(N * D + N * dout) * ob
        + (D * inner + inner * dout) * cb + (inner + dout) * 4,
    )

    out = pl.pallas_call(
        _ff_kernel,
        out_shape=jax.ShapeDtypeStruct((Np, dout), x.dtype),
        grid_spec=pltpu.PrefetchScalarGridSpec(
            num_scalar_prefetch=0,
            grid=grid,
            in_specs=[
                pl.BlockSpec((tm_eff, D), lambda i, j: (i, 0)),   # x tokens
                pl.BlockSpec((D, ti), lambda i, j: (0, j)),       # w1 column chunk
                pl.BlockSpec((1, ti), lambda i, j: (0, j)),       # b1 chunk
                pl.BlockSpec((ti, dout), lambda i, j: (j, 0)),    # w2 row chunk
                pl.BlockSpec((1, dout), lambda i, j: (0, 0)),     # b2
            ],
            out_specs=pl.BlockSpec((tm_eff, dout), lambda i, j: (i, 0)),
            scratch_shapes=[pltpu.VMEM((tm_eff, dout), jnp.float32)],
        ),
        compiler_params=pltpu.CompilerParams(
            dimension_semantics=("parallel", "arbitrary"),
            vmem_limit_bytes=vmem_limit),
        cost_estimate=cost,
    )(x2, w1c, b1_2, w2c, b2_2)

    return out[:N].reshape(B, S, dout)


def init_params(key, dim, mult=4, dim_out=None):
    """Deterministic init mimicking nn.Linear defaults (U(-1/sqrt(fan_in), +))."""
    inner = int(dim * mult)
    dim_out = dim if dim_out is None else dim_out
    k1, k2, k3, k4 = jax.random.split(key, 4)
    bound1 = 1.0 / math.sqrt(dim)
    bound2 = 1.0 / math.sqrt(inner)
    # Stored already transposed for y = x @ W + b (PyTorch stores (out, in)).
    w1 = jax.random.uniform(k1, (dim, inner), jnp.float32, -bound1, bound1)
    b1 = jax.random.uniform(k2, (inner,), jnp.float32, -bound1, bound1)
    w2 = jax.random.uniform(k3, (inner, dim_out), jnp.float32, -bound2, bound2)
    b2 = jax.random.uniform(k4, (dim_out,), jnp.float32, -bound2, bound2)
    return w1, b1, w2, b2


def feed_forward_ref(x, w1, b1, w2, b2):
    h = _gelu_exact(x @ w1 + b1)
    return h @ w2 + b2


if __name__ == "__main__":
    key = jax.random.PRNGKey(0)
    kx, kp = jax.random.split(key)

    B, S, dim = 2, 8, 32       # inner_dim = 4 * 32 = 128, dim_out = dim
    x = jax.random.normal(kx, (B, S, dim), jnp.float32)
    w1, b1, w2, b2 = init_params(kp, dim, mult=4)

    y_ref = feed_forward_ref(x, w1, b1, w2, b2)

    # Exact-precision path: matches the PyTorch module's f32 semantics.
    y_f32 = feed_forward(x, w1, b1, w2, b2, compute_dtype=jnp.float32)
    y_f32 = jax.block_until_ready(y_f32)
    assert y_f32.shape == (B, S, dim)
    assert jnp.allclose(y_f32, y_ref, atol=1e-5, rtol=1e-5)

    # Performance path: bf16 MXU operands with f32 accumulation.
    y_bf16 = feed_forward(x, w1, b1, w2, b2, compute_dtype=jnp.bfloat16)
    y_bf16 = jax.block_until_ready(y_bf16)
    assert y_bf16.shape == (B, S, dim)
    assert jnp.allclose(y_bf16, y_ref, atol=5e-2, rtol=5e-2)

    print("KERNEL_OK")
</pallas_src>

<mosaic_0001>
module attributes {stable_mosaic.version = 11 : i64} {
  func.func @_ff_kernel(%arg0: i32, %arg1: i32, %arg2: memref<16x32xf32, #tpu.memory_space<vmem>>, %arg3: memref<32x128xf32, #tpu.memory_space<vmem>>, %arg4: memref<1x128xf32, #tpu.memory_space<vmem>>, %arg5: memref<128x32xf32, #tpu.memory_space<vmem>>, %arg6: memref<1x32xf32, #tpu.memory_space<vmem>>, %arg7: memref<16x32xf32, #tpu.memory_space<vmem>>, %arg8: memref<16x32xf32, #tpu.memory_space<vmem>>) attributes {dimension_semantics = [#tpu.dimension_semantics<parallel>, #tpu.dimension_semantics<arbitrary>], iteration_bounds = array<i64: 1, 1>, scalar_prefetch = 0 : i64, scratch_operands = 1 : i64, tpu.core_type = #tpu.core_type<tc>, window_params = [{transform_indices = @transform_0, window_bounds = array<i64: 16, 32>}, {transform_indices = @transform_1, window_bounds = array<i64: 32, 128>}, {transform_indices = @transform_2, window_bounds = array<i64: 1, 128>}, {transform_indices = @transform_3, window_bounds = array<i64: 128, 32>}, {pipeline_mode = #tpu.pipeline_mode<synchronous>, transform_indices = @transform_4, window_bounds = array<i64: 1, 32>}, {transform_indices = @transform_5, window_bounds = array<i64: 16, 32>}]} {
    %c0_i32 = arith.constant 0 : i32
    %0 = arith.cmpi eq, %arg1, %c0_i32 : i32
    %1 = arith.extui %0 : i1 to i32
    %c0_i32_0 = arith.constant 0 : i32
    %2 = arith.cmpi ne, %1, %c0_i32_0 : i32
    scf.if %2 {
      %cst_18 = arith.constant 0.000000e+00 : f32
      %25 = vector.broadcast %cst_18 : f32 to vector<16x32xf32>
      %c0_19 = arith.constant 0 : index
      %c0_20 = arith.constant 0 : index
      %26 = vector.load %arg8[%c0_19, %c0_20] : memref<16x32xf32, #tpu.memory_space<vmem>>, vector<16x32xf32>
      tpu.vector_store %arg8[%c0_19, %c0_20], %25 {strides = array<i32>} : memref<16x32xf32, #tpu.memory_space<vmem>>, vector<16x32xf32>,
    } else {
    }
    %c0 = arith.constant 0 : index
    %c0_1 = arith.constant 0 : index
    %3 = vector.load %arg2[%c0, %c0_1] : memref<16x32xf32, #tpu.memory_space<vmem>>, vector<16x32xf32>
    %c0_2 = arith.constant 0 : index
    %c0_3 = arith.constant 0 : index
    %4 = vector.load %arg3[%c0_2, %c0_3] : memref<32x128xf32, #tpu.memory_space<vmem>>, vector<32x128xf32>
    %cst = arith.constant dense<0.000000e+00> : vector<16x128xf32>
    %5 = tpu.matmul %3, %4, %cst {dimension_numbers = #tpu.dot_dimension_numbers<[1], [0], [0], [1], [0, 0, 1, 1], [], []>} : vector<16x32xf32>, vector<32x128xf32>, vector<16x128xf32> -> vector<16x128xf32>
    %c0_4 = arith.constant 0 : index
    %c0_5 = arith.constant 0 : index
    %6 = vector.load %arg4[%c0_4, %c0_5] : memref<1x128xf32, #tpu.memory_space<vmem>>, vector<1x128xf32>
    %7 = vector.broadcast %6 : vector<1x128xf32> to vector<16x128xf32>
    %8 = arith.addf %5, %7 : vector<16x128xf32>
    %cst_6 = arith.constant 5.000000e-01 : f32
    %9 = vector.broadcast %cst_6 : f32 to vector<16x128xf32>
    %10 = arith.mulf %9, %8 : vector<16x128xf32>
    %cst_7 = arith.constant 0.707106769 : f32
    %11 = vector.broadcast %cst_7 : f32 to vector<16x128xf32>
    %12 = arith.mulf %8, %11 : vector<16x128xf32>
    %13 = math.erf %12 : vector<16x128xf32>
    %cst_8 = arith.constant 1.000000e+00 : f32
    %14 = vector.broadcast %cst_8 : f32 to vector<16x128xf32>
    %15 = arith.addf %14, %13 : vector<16x128xf32>
    %16 = arith.mulf %10, %15 : vector<16x128xf32>
    %c0_9 = arith.constant 0 : index
    %c0_10 = arith.constant 0 : index
    %17 = vector.load %arg8[%c0_9, %c0_10] : memref<16x32xf32, #tpu.memory_space<vmem>>, vector<16x32xf32>
    %c0_11 = arith.constant 0 : index
    %c0_12 = arith.constant 0 : index
    %18 = vector.load %arg5[%c0_11, %c0_12] : memref<128x32xf32, #tpu.memory_space<vmem>>, vector<128x32xf32>
    %cst_13 = arith.constant dense<0.000000e+00> : vector<16x32xf32>
    %19 = tpu.matmul %16, %18, %cst_13 {dimension_numbers = #tpu.dot_dimension_numbers<[1], [0], [0], [1], [0, 0, 1, 1], [], []>} : vector<16x128xf32>, vector<128x32xf32>, vector<16x32xf32> -> vector<16x32xf32>
    %20 = arith.addf %17, %19 : vector<16x32xf32>
    %c0_14 = arith.constant 0 : index
    %c0_15 = arith.constant 0 : index
    %21 = vector.load %arg8[%c0_14, %c0_15] : memref<16x32xf32, #tpu.memory_space<vmem>>, vector<16x32xf32>
    tpu.vector_store %arg8[%c0_14, %c0_15], %20 {strides = array<i32>} : memref<16x32xf32, #tpu.memory_space<vmem>>, vector<16x32xf32>,
    %c0_i32_16 = arith.constant 0 : i32
    %22 = arith.cmpi eq, %arg1, %c0_i32_16 : i32
    %23 = arith.extui %22 : i1 to i32
    %c0_i32_17 = arith.constant 0 : i32
    %24 = arith.cmpi ne, %23, %c0_i32_17 : i32
    scf.if %24 {
      %c0_18 = arith.constant 0 : index
      %c0_19 = arith.constant 0 : index
      %25 = vector.load %arg8[%c0_18, %c0_19] : memref<16x32xf32, #tpu.memory_space<vmem>>, vector<16x32xf32>
      %c0_20 = arith.constant 0 : index
      %c0_21 = arith.constant 0 : index
      %26 = vector.load %arg6[%c0_20, %c0_21] : memref<1x32xf32, #tpu.memory_space<vmem>>, vector<1x32xf32>
      %27 = vector.broadcast %26 : vector<1x32xf32> to vector<16x32xf32>
      %28 = arith.addf %25, %27 : vector<16x32xf32>
      %c0_22 = arith.constant 0 : index
      %c0_23 = arith.constant 0 : index
      %29 = vector.load %arg7[%c0_22, %c0_23] : memref<16x32xf32, #tpu.memory_space<vmem>>, vector<16x32xf32>
      tpu.vector_store %arg7[%c0_22, %c0_23], %28 {strides = array<i32>} : memref<16x32xf32, #tpu.memory_space<vmem>>, vector<16x32xf32>,
    } else {
    }
    return
  }
  func.func @transform_0(%arg0: i32, %arg1: i32) -> (i32, i32) {
    %c0_i32 = arith.constant 0 : i32
    %c0_i32_0 = arith.constant 0 : i32
    return %arg0, %c0_i32 : i32, i32
  }
  func.func @transform_1(%arg0: i32, %arg1: i32) -> (i32, i32) {
    %c0_i32 = arith.constant 0 : i32
    %c0_i32_0 = arith.constant 0 : i32
    return %c0_i32, %arg1 : i32, i32
  }
  func.func @transform_2(%arg0: i32, %arg1: i32) -> (i32, i32) {
    %c0_i32 = arith.constant 0 : i32
    %c0_i32_0 = arith.constant 0 : i32
    return %c0_i32, %arg1 : i32, i32
  }
  func.func @transform_3(%arg0: i32, %arg1: i32) -> (i32, i32) {
    %c0_i32 = arith.constant 0 : i32
    %c0_i32_0 = arith.constant 0 : i32
    return %arg1, %c0_i32 : i32, i32
  }
  func.func @transform_4(%arg0: i32, %arg1: i32) -> (i32, i32) {
    %c0_i32 = arith.constant 0 : i32
    %c0_i32_0 = arith.constant 0 : i32
    %c0_i32_1 = arith.constant 0 : i32
    return %c0_i32, %c0_i32_0 : i32, i32
  }
  func.func @transform_5(%arg0: i32, %arg1: i32) -> (i32, i32) {
    %c0_i32 = arith.constant 0 : i32
    %c0_i32_0 = arith.constant 0 : i32
    return %arg0, %c0_i32 : i32, i32
  }
}

</mosaic_0001>

<llo_original>
// kernel: tpu_custom_call.1
$region0: #{tpu_custom_call.1}
  #allocation0 [shape = 'u32[]', space=smem, size = 0x4, offset = 0x4, fixed_abs, tag = 'smem constant byte address 0x4 - core index']
  #allocation1 [shape = 'u32[144,128]{1,0:T(1,128)}', space=vmem, size = 0x12000, scoped, tag = 'internal scratch']
  #allocation2 [shape = 'f32[16,32]{1,0:T(8,128)}', space=vmem, size = 0x2000, scoped, tag = 'scratch operand']
  %s0 = inlined_call_operand.vmem [shape: f32[16,32], index: 0, kind: input, shape index: {}]
  %s1 = inlined_call_operand.vmem [shape: f32[32,128], index: 1, kind: input, shape index: {}]
  %s2 = inlined_call_operand.vmem [shape: f32[1,128], index: 2, kind: input, shape index: {}]
  %s3 = inlined_call_operand.vmem [shape: f32[128,32], index: 3, kind: input, shape index: {}]
  %s4 = inlined_call_operand.vmem [shape: f32[1,32], index: 4, kind: input, shape index: {}]
  %s5 = inlined_call_operand.hbm [shape: f32[16,32], index: 5, kind: output, shape index: {}]
  %s6 = sld [smem:[#allocation0]]
  $region38: #{tpu_custom_call.1} parent=0
    _
  %s8 = ssub.s32 1, %s6
  %s9 = scalar_select 0, %s8, %s6
  $region1: #{tpu_custom_call.1} parent=0
    #allocation3 [shape = 'u8[8192]{0}', space=vmem, size = 0x2000, scoped, tag = 'output window, operand 0, single buffered']
    #allocation4 [shape = 's32[1]{0}', space=sflag, size = 0x4, scoped, tag = 'scoped memory for tpu_custom_call.1']
    %10 = vsyncpa [#allocation4], 0
    // Predicated region
    $region2: #{tpu_custom_call.1} parent=1 // pred_check
      _
    $region3: #{tpu_custom_call.1} parent=1 // pred_check_branch
      %12 = sbr.rel (0) target = $region5
    $region4: #{tpu_custom_call.1} parent=1 // pred_region
      _
    $region5: #{tpu_custom_call.1} parent=1 // pred_fallthru
      _
    // Predicated region
    $region6: #{tpu_custom_call.1} parent=1 // pred_check
      _
    $region7: #{tpu_custom_call.1} parent=1 // pred_check_branch
      %14 = sbr.rel (0) target = $region9
    $region8: #{tpu_custom_call.1} parent=1 // pred_region
      _
    $region9: #{tpu_custom_call.1} parent=1 // pred_fallthru
      _
    // Predicated region
    $region10: #{tpu_custom_call.1} parent=1 // pred_check
      _
    $region11: #{tpu_custom_call.1} parent=1 // pred_check_branch
      %16 = sbr.rel (0) target = $region13
    $region12: #{tpu_custom_call.1} parent=1 // pred_region
      _
    $region13: #{tpu_custom_call.1} parent=1 // pred_fallthru
      _
    // Predicated region
    $region14: #{tpu_custom_call.1} parent=1 // pred_check
      _
    $region15: #{tpu_custom_call.1} parent=1 // pred_check_branch
      %18 = sbr.rel (0) target = $region17
    $region16: #{tpu_custom_call.1} parent=1 // pred_region
      _
    $region17: #{tpu_custom_call.1} parent=1 // pred_fallthru
      _
    // Predicated region
    $region18: #{tpu_custom_call.1} parent=1 // pred_check
      _
    $region19: #{tpu_custom_call.1} parent=1 // pred_check_branch
      %20 = sbr.rel (0) target = $region21
    $region20: #{tpu_custom_call.1} parent=1 // pred_region
      _
    $region21: #{tpu_custom_call.1} parent=1 // pred_fallthru
      _
    %p21 = scmp.eq.s32.totalorder 0, 0
    // Predicated region
    $region22: #{tpu_custom_call.1} parent=1 // pred_check
      %p22 = pneg %p21
    $region23: #{tpu_custom_call.1} parent=1 // pred_check_branch
      %24 = sbr.rel (%p22) target = $region25
    $region24: #{tpu_custom_call.1} parent=1 // pred_region
      %vm25 = vcmask 261120
      %26 = vst.msk [vmem:[#allocation2] sm:$0xff] %vm25, 0.0
      %27 = vst.msk [vmem:[#allocation2 + $0x8] sm:$0xff] %vm25, 0.0
    $region25: #{tpu_custom_call.1} parent=1 // pred_fallthru
      _
    %v28 = vld [vmem:[%s0] sm:$0xff]
    %v29 = vld [vmem:[%s0 + $0x8] sm:$0xff]
    %v30 = vld [vmem:[%s1] sm:$0xff]
    %v31 = vld [vmem:[%s1 + $0x8] sm:$0xff]
    %v32 = vld [vmem:[%s1 + $0x10] sm:$0xff]
    %v33 = vld [vmem:[%s1 + $0x18] sm:$0xff]
    %v34 = vld [vmem:[%s2] sm:$0x1]
    %v36 = vlaneseq
    %v37 = vshrl.u32 %v36, 7
    %v38 = vsub.s32 0, %v37
    %v39 = vrot.slane %v34, %v38
    %vm41 = vcmask 261120
    %v43 = vsel %vm41, %v28, 0
    %v46 = vsel %vm41, %v29, 0
    %48 = vmatprep.subr.mxu0 0.0
    %49 = vmatpush1.msra.mxu0 0.0
    %50 = vmatprep.subr.mxu0 0.0
    %51 = vmatpush1.msra.mxu0 0.0
    %52 = vmatprep.subr.mxu0 0.0
    %53 = vmatpush1.msra.mxu0 0.0
    %54 = vmatprep.subr.mxu0 0.0
    %55 = vmatpush1.msra.mxu0 0.0
    %56 = vmatprep.subr.mxu0 0.0
    %57 = vmatpush1.msra.mxu0 0.0
    %58 = vmatprep.subr.mxu0 0.0
    %59 = vmatpush1.msra.mxu0 0.0
    %60 = vmatprep.subr.mxu0 0.0
    %61 = vmatpush1.msra.mxu0 0.0
    %62 = vmatprep.subr.mxu0 0.0
    %63 = vmatpush1.msra.mxu0 0.0
    %64 = vmatprep.subr.mxu0 0.0
    %65 = vmatpush1.msra.mxu0 0.0
    %66 = vmatprep.subr.mxu0 0.0
    %67 = vmatpush1.msra.mxu0 0.0
    %68 = vmatprep.subr.mxu0 0.0
    %69 = vmatpush1.msra.mxu0 0.0
    %70 = vmatprep.subr.mxu0 0.0
    %71 = vmatpush1.msra.mxu0 0.0
    %72 = vmatprep.subr.mxu0 0.0
    %73 = vmatpush1.msra.mxu0 %v33
    %74 = vmatprep.subr.mxu0 0.0
    %75 = vmatpush1.msra.mxu0 %v32
    %76 = vmatprep.subr.mxu0 0.0
    %77 = vmatpush1.msra.mxu0 %v31
    %78 = vmatprep.subr.mxu0 0.0
    %79 = vmatpush1.msra.mxu0 %v30
    %80 = vmatprep.subr.mxu0 0.0
    %81 = vmatpush2.msra.mxu0 0.0
    %82 = vmatprep.subr.mxu0 0.0
    %83 = vmatpush2.msra.mxu0 0.0
    %84 = vmatprep.subr.mxu0 0.0
    %85 = vmatpush2.msra.mxu0 0.0
    %86 = vmatprep.subr.mxu0 0.0
    %87 = vmatpush2.msra.mxu0 0.0
    %88 = vmatprep.subr.mxu0 0.0
    %89 = vmatpush2.msra.mxu0 0.0
    %90 = vmatprep.subr.mxu0 0.0
    %91 = vmatpush2.msra.mxu0 0.0
    %92 = vmatprep.subr.mxu0 0.0
    %93 = vmatpush2.msra.mxu0 0.0
    %94 = vmatprep.subr.mxu0 0.0
    %95 = vmatpush2.msra.mxu0 0.0
    %96 = vmatprep.subr.mxu0 0.0
    %97 = vmatpush2.msra.mxu0 0.0
    %98 = vmatprep.subr.mxu0 0.0
    %99 = vmatpush2.msra.mxu0 0.0
    %100 = vmatprep.subr.mxu0 0.0
    %101 = vmatpush2.msra.mxu0 0.0
    %102 = vmatprep.subr.mxu0 0.0
    %103 = vmatpush2.msra.mxu0 0.0
    %104 = vmatprep.subr.mxu0 0.0
    %105 = vmatpush2.msra.mxu0 0.0
    %106 = vmatprep.subr.mxu0 0.0
    %107 = vmatpush2.msra.mxu0 0.0
    %108 = vmatprep.subr.mxu0 0.0
    %109 = vmatpush2.msra.mxu0 0.0
    %110 = vmatprep.subr.mxu0 0.0
    %111 = vmatpush2.msra.mxu0 0.0
    %112 = vmatprep.mubr.f32.mxu0 0.0
    %113 = vmatmul.mubr.f32.gmra.mxu0 %v43
    %v114 = vpop.f32.mrf.mxu0
    %v115 = vadd.f32 %v39, %v114
    %v116 = vpop.f32.mrf.mxu0
    %117 = vmatprep.mubr.f32.mxu0 0.0
    %118 = vmatmul.mubr.f32.gmra.mxu0 %v46
    %v119 = vpop.f32.mrf.mxu0
    %v120 = vadd.f32 %v39, %v119
    %v121 = vpop.f32.mrf.mxu0
    %122 = vdwg.mxu0
    %v123 = vmul.f32 %v115, 0.5
    %v124 = vmul.f32 %v120, 0.5
    %v125 = vmul.f32 %v115, 0.70710677
    %v126 = vmul.f32 %v120, 0.70710677
    %v127 = verf.f32.pop %v125
    %v128 = verf.f32.pop %v126
    %v129 = vadd.f32 %v127, 1.0
    %v130 = vadd.f32 %v128, 1.0
    %v131 = vmul.f32 %v123, %v129
    %v132 = vmul.f32 %v124, %v130
    %v133 = vld [vmem:[#allocation2] sm:$0xff]
    %v134 = vld [vmem:[#allocation2 + $0x8] sm:$0xff]
    %v135 = vld [vmem:[%s3] sm:$0xff]
    %v136 = vld [vmem:[%s3 + $0x8] sm:$0xff]
    %v137 = vld [vmem:[%s3 + $0x10] sm:$0xff]
    %v138 = vld [vmem:[%s3 + $0x18] sm:$0xff]
    %v139 = vld [vmem:[%s3 + $0x20] sm:$0xff]
    %v140 = vld [vmem:[%s3 + $0x28] sm:$0xff]
    %v141 = vld [vmem:[%s3 + $0x30] sm:$0xff]
    %v142 = vld [vmem:[%s3 + $0x38] sm:$0xff]
    %v143 = vld [vmem:[%s3 + $0x40] sm:$0xff]
    %v144 = vld [vmem:[%s3 + $0x48] sm:$0xff]
    %v145 = vld [vmem:[%s3 + $0x50] sm:$0xff]
    %v146 = vld [vmem:[%s3 + $0x58] sm:$0xff]
    %v147 = vld [vmem:[%s3 + $0x60] sm:$0xff]
    %v148 = vld [vmem:[%s3 + $0x68] sm:$0xff]
    %v149 = vld [vmem:[%s3 + $0x70] sm:$0xff]
    %v150 = vld [vmem:[%s3 + $0x78] sm:$0xff]
    %151 = vmatprep.subr.mxu0 0.0
    %152 = vmatpush1.msra.mxu0 %v150
    %153 = vmatprep.subr.mxu0 0.0
    %154 = vmatpush1.msra.mxu0 %v149
    %155 = vmatprep.subr.mxu0 0.0
    %156 = vmatpush1.msra.mxu0 %v148
    %157 = vmatprep.subr.mxu0 0.0
    %158 = vmatpush1.msra.mxu0 %v147
    %159 = vmatprep.subr.mxu0 0.0
    %160 = vmatpush1.msra.mxu0 %v146
    %161 = vmatprep.subr.mxu0 0.0
    %162 = vmatpush1.msra.mxu0 %v145
    %163 = vmatprep.subr.mxu0 0.0
    %164 = vmatpush1.msra.mxu0 %v144
    %165 = vmatprep.subr.mxu0 0.0
    %166 = vmatpush1.msra.mxu0 %v143
    %167 = vmatprep.subr.mxu0 0.0
    %168 = vmatpush1.msra.mxu0 %v142
    %169 = vmatprep.subr.mxu0 0.0
    %170 = vmatpush1.msra.mxu0 %v141
    %171 = vmatprep.subr.mxu0 0.0
    %172 = vmatpush1.msra.mxu0 %v140
    %173 = vmatprep.subr.mxu0 0.0
    %174 = vmatpush1.msra.mxu0 %v139
    %175 = vmatprep.subr.mxu0 0.0
    %176 = vmatpush1.msra.mxu0 %v138
    %177 = vmatprep.subr.mxu0 0.0
    %178 = vmatpush1.msra.mxu0 %v137
    %179 = vmatprep.subr.mxu0 0.0
    %180 = vmatpush1.msra.mxu0 %v136
    %181 = vmatprep.subr.mxu0 0.0
    %182 = vmatpush1.msra.mxu0 %v135
    %183 = vmatprep.subr.mxu0 0.0
    %184 = vmatpush2.msra.mxu0 0.0
    %185 = vmatprep.subr.mxu0 0.0
    %186 = vmatpush2.msra.mxu0 0.0
    %187 = vmatprep.subr.mxu0 0.0
    %188 = vmatpush2.msra.mxu0 0.0
    %189 = vmatprep.subr.mxu0 0.0
    %190 = vmatpush2.msra.mxu0 0.0
    %191 = vmatprep.subr.mxu0 0.0
    %192 = vmatpush2.msra.mxu0 0.0
    %193 = vmatprep.subr.mxu0 0.0
    %194 = vmatpush2.msra.mxu0 0.0
    %195 = vmatprep.subr.mxu0 0.0
    %196 = vmatpush2.msra.mxu0 0.0
    %197 = vmatprep.subr.mxu0 0.0
    %198 = vmatpush2.msra.mxu0 0.0
    %199 = vmatprep.subr.mxu0 0.0
    %200 = vmatpush2.msra.mxu0 0.0
    %201 = vmatprep.subr.mxu0 0.0
    %202 = vmatpush2.msra.mxu0 0.0
    %203 = vmatprep.subr.mxu0 0.0
    %204 = vmatpush2.msra.mxu0 0.0
    %205 = vmatprep.subr.mxu0 0.0
    %206 = vmatpush2.msra.mxu0 0.0
    %207 = vmatprep.subr.mxu0 0.0
    %208 = vmatpush2.msra.mxu0 0.0
    %209 = vmatprep.subr.mxu0 0.0
    %210 = vmatpush2.msra.mxu0 0.0
    %211 = vmatprep.subr.mxu0 0.0
    %212 = vmatpush2.msra.mxu0 0.0
    %213 = vmatprep.subr.mxu0 0.0
    %214 = vmatpush2.msra.mxu0 0.0
    %215 = vmatprep.mubr.f32.mxu0 0.0
    %216 = vmatmul.mubr.f32.gmra.mxu0 %v131
    %v217 = vpop.f32.mrf.mxu0
    %v218 = vadd.f32 0.0, %v217
    %v219 = vpop.f32.mrf.mxu0
    %220 = vmatprep.mubr.f32.mxu0 0.0
    %221 = vmatmul.mubr.f32.gmra.mxu0 %v132
    %v222 = vpop.f32.mrf.mxu0
    %v223 = vadd.f32 0.0, %v222
    %v224 = vpop.f32.mrf.mxu0
    %225 = vdwg.mxu0
    %v226 = vadd.f32 %v133, %v218
    %v227 = vadd.f32 %v134, %v223
    %228 = vst.msk [vmem:[#allocation2] sm:$0xff] %vm41, %v226
    %229 = vst.msk [vmem:[#allocation2 + $0x8] sm:$0xff] %vm41, %v227
    // Predicated region
    $region26: #{tpu_custom_call.1} parent=1 // pred_check
      %p230 = pneg %p21
    $region27: #{tpu_custom_call.1} parent=1 // pred_check_branch
      %232 = sbr.rel (%p230) target = $region29
    $region28: #{tpu_custom_call.1} parent=1 // pred_region
      %v233 = vld [vmem:[#allocation2] sm:$0xff]
      %v234 = vld [vmem:[#allocation2 + $0x8] sm:$0xff]
      %v235 = vld [vmem:[%s4] sm:$0x1]
      %v237 = vlaneseq
      %v238 = vshrl.u32 %v237, 7
      %v239 = vsub.s32 0, %v238
      %v240 = vrot.slane %v235, %v239
      %v242 = vadd.f32 %v233, %v240
      %v243 = vadd.f32 %v234, %v240
      %244 = vst.msk [vmem:[#allocation3] sm:$0xff] %vm41, %v242
      %245 = vst.msk [vmem:[#allocation3 + $0x8] sm:$0xff] %vm41, %v243
    $region29: #{tpu_custom_call.1} parent=1 // pred_fallthru
      _
    // Predicated region
    $region30: #{tpu_custom_call.1} parent=1 // pred_check
      _
    $region31: #{tpu_custom_call.1} parent=1 // pred_check_branch
      %247 = sbr.rel (0) target = $region33
    $region32: #{tpu_custom_call.1} parent=1 // pred_region
      %s249 = ssub.s32 256, 256
      %250 = vsyncadd [#allocation4], %s249
      %s251 = sshll.u32 [#allocation3], 4
      %s252 = int_to_ptr.vmem [resolvable:$true] %s251
      %257 = dma.vmem_to_hbm [thread:$0]  %s252, 256, %s5, [#allocation4], 128, 128, 8
    $region33: #{tpu_custom_call.1} parent=1 // pred_fallthru
      _
    // Predicated region
    $region34: #{tpu_custom_call.1} parent=1 // pred_check
      _
    $region35: #{tpu_custom_call.1} parent=1 // pred_check_branch
      %259 = sbr.rel (0) target = $region37
    $region36: #{tpu_custom_call.1} parent=1 // pred_region
      %260 = dma.done [#allocation4], 256
    $region37: #{tpu_custom_call.1} parent=1 // pred_fallthru
      _
    %261 = vsyncpa [#allocation4], 1

</llo_original>
